<compile_context>
chip_gen: v7x
topology: tpu7x:2x2x1
jax: 0.10.0
libtpu: 0.0.40
codegen_flags: <defaults>
</compile_context>

<pallas_src>
import functools
import math

import jax
import jax.numpy as jnp
from jax.experimental import pallas as pl
from jax.experimental.pallas import tpu as pltpu


# -----------------------------------------------------------------------------
# Per-generation configuration & helpers
# -----------------------------------------------------------------------------
def _tpu_generation():
    try:
        kind = jax.devices()[0].device_kind.lower()
    except Exception:
        return 0
    for g in (7, 6, 5, 4):
        if "v%d" % g in kind:
            return g
    return 0


_TPU_GEN = _tpu_generation()
# v7x: 64 MiB physical VMEM per TensorCore; v4/v5e/v6e: 128 MiB.
_VMEM_CEILING = (48 if _TPU_GEN >= 7 else 100) * 1024 * 1024
_EPILOGUE_MAX_TM = 256 if _TPU_GEN >= 7 else 512   # whole-d_model epilogues
_FFN_MAX_TF = 256 if _TPU_GEN >= 7 else 512        # f32 (tm, tf) intermediate


def _pick_tile(dim, max_tile=512, min_tiles=1):
    """Largest multiple-of-128 divisor of `dim` (<= max_tile).

    Falls back to the full dim for small/odd dims.  min_tiles>1 prefers a
    smaller tile so a 'parallel' axis has at least that many grid steps
    (keeps both v7x TensorCores busy)."""
    divisors = [c for c in range(max_tile, 127, -128) if dim % c == 0]
    if not divisors:
        return dim
    for c in divisors:
        if dim // c >= min_tiles:
            return c
    return divisors[0]


def _nbytes(shape, dtype):
    n = 1
    for s in shape:
        n *= s
    return n * jnp.dtype(dtype).itemsize


def _cparams(semantics, pipelined_blocks, resident_bytes=0):
    """Footprint-derived scoped-VMEM limit, clamped per TPU generation.

    pipelined_blocks: iterable of (shape, dtype) that Pallas double-buffers.
    resident_bytes: scratch (single-buffered) bytes."""
    need = 2 * sum(_nbytes(s, d) for s, d in pipelined_blocks) + resident_bytes
    limit = int(min(_VMEM_CEILING, max(need + need // 4, 32 * 1024 * 1024)))
    return pltpu.CompilerParams(dimension_semantics=semantics,
                                vmem_limit_bytes=limit)


# -----------------------------------------------------------------------------
# Kernel 1: tiled matmul + bias (+ optional ReLU), bf16 operands / f32 acc
# -----------------------------------------------------------------------------
def _matmul_bias_kernel(x_ref, w_ref, b_ref, o_ref, acc_ref, *, relu):
    @pl.when(pl.program_id(2) == 0)
    def _():
        acc_ref[...] = jnp.zeros_like(acc_ref)

    acc_ref[...] += jnp.dot(x_ref[...], w_ref[...],
                            preferred_element_type=jnp.float32)

    @pl.when(pl.program_id(2) == pl.num_programs(2) - 1)
    def _():
        y = acc_ref[...] + b_ref[...]
        if relu:
            y = jnp.maximum(y, 0.0)
        o_ref[...] = y.astype(o_ref.dtype)


def matmul_bias(x, w, b, relu=False, out_dtype=jnp.bfloat16):
    """x: (M, K) @ w: (K, N) + b: (N,) -> (M, N)."""
    M, K = x.shape
    N = w.shape[1]
    tm = _pick_tile(M, min_tiles=2)
    tn = _pick_tile(N)
    tk = _pick_tile(K)
    kernel = functools.partial(_matmul_bias_kernel, relu=relu)
    cparams = _cparams(
        ("parallel", "parallel", "arbitrary"),
        [((tm, tk), jnp.bfloat16), ((tk, tn), jnp.bfloat16),
         ((1, tn), jnp.float32), ((tm, tn), out_dtype)],
        resident_bytes=_nbytes((tm, tn), jnp.float32))
    return pl.pallas_call(
        kernel,
        out_shape=jax.ShapeDtypeStruct((M, N), out_dtype),
        grid=(M // tm, N // tn, K // tk),
        in_specs=[
            pl.BlockSpec((tm, tk), lambda i, j, k: (i, k)),
            pl.BlockSpec((tk, tn), lambda i, j, k: (k, j)),
            pl.BlockSpec((1, tn), lambda i, j, k: (0, j)),
        ],
        out_specs=pl.BlockSpec((tm, tn), lambda i, j, k: (i, j)),
        scratch_shapes=[pltpu.VMEM((tm, tn), jnp.float32)],
        compiler_params=cparams,
    )(x.astype(jnp.bfloat16), w.astype(jnp.bfloat16),
      b.reshape(1, N).astype(jnp.float32))


# -----------------------------------------------------------------------------
# Kernel 2: tiled matmul + bias + residual add + LayerNorm epilogue
# (N = d_model kept whole so the LN row reduction stays in-block)
# -----------------------------------------------------------------------------
def _matmul_res_ln_kernel(x_ref, w_ref, b_ref, r_ref, g_ref, bb_ref,
                          o_ref, acc_ref, *, eps):
    @pl.when(pl.program_id(1) == 0)
    def _():
        acc_ref[...] = jnp.zeros_like(acc_ref)

    acc_ref[...] += jnp.dot(x_ref[...], w_ref[...],
                            preferred_element_type=jnp.float32)

    @pl.when(pl.program_id(1) == pl.num_programs(1) - 1)
    def _():
        z = acc_ref[...] + b_ref[...] + r_ref[...].astype(jnp.float32)
        mean = jnp.mean(z, axis=-1, keepdims=True)
        var = jnp.mean(jnp.square(z - mean), axis=-1, keepdims=True)
        zn = (z - mean) * jax.lax.rsqrt(var + eps)
        o_ref[...] = (zn * g_ref[...] + bb_ref[...]).astype(o_ref.dtype)


def matmul_residual_layernorm(x, w, b, residual, gamma, beta,
                              eps=1e-5, out_dtype=jnp.bfloat16):
    """LayerNorm(residual + (x @ w + b)).  x: (M, K), w: (K, N), residual: (M, N)."""
    M, K = x.shape
    N = w.shape[1]
    tm = _pick_tile(M, max_tile=_EPILOGUE_MAX_TM, min_tiles=2)
    tk = _pick_tile(K)
    kernel = functools.partial(_matmul_res_ln_kernel, eps=eps)
    cparams = _cparams(
        ("parallel", "arbitrary"),
        [((tm, tk), jnp.bfloat16), ((tk, N), jnp.bfloat16),
         ((1, N), jnp.float32), ((tm, N), jnp.bfloat16),
         ((1, N), jnp.float32), ((1, N), jnp.float32),
         ((tm, N), out_dtype)],
        resident_bytes=_nbytes((tm, N), jnp.float32))
    return pl.pallas_call(
        kernel,
        out_shape=jax.ShapeDtypeStruct((M, N), out_dtype),
        grid=(M // tm, K // tk),
        in_specs=[
            pl.BlockSpec((tm, tk), lambda i, k: (i, k)),
            pl.BlockSpec((tk, N), lambda i, k: (k, 0)),
            pl.BlockSpec((1, N), lambda i, k: (0, 0)),
            pl.BlockSpec((tm, N), lambda i, k: (i, 0)),
            pl.BlockSpec((1, N), lambda i, k: (0, 0)),
            pl.BlockSpec((1, N), lambda i, k: (0, 0)),
        ],
        out_specs=pl.BlockSpec((tm, N), lambda i, k: (i, 0)),
        scratch_shapes=[pltpu.VMEM((tm, N), jnp.float32)],
        compiler_params=cparams,
    )(x.astype(jnp.bfloat16), w.astype(jnp.bfloat16),
      b.reshape(1, N).astype(jnp.float32),
      residual.astype(jnp.bfloat16),
      gamma.reshape(1, N).astype(jnp.float32),
      beta.reshape(1, N).astype(jnp.float32))


# -----------------------------------------------------------------------------
# Kernel 3: fused position-wise FFN (w1 + bias + ReLU + w2) + residual + LN.
# Grid reduces over d_ff tiles; the (tm, d_ff) intermediate stays in VMEM.
# The single bf16 x operand is reused as matmul input AND residual.
# -----------------------------------------------------------------------------
def _ffn_res_ln_kernel(x_ref, w1_ref, b1_ref, w2_ref, b2_ref, g_ref,
                       bb_ref, o_ref, acc_ref, *, eps):
    @pl.when(pl.program_id(1) == 0)
    def _():
        acc_ref[...] = jnp.zeros_like(acc_ref)

    h = jnp.dot(x_ref[...], w1_ref[...], preferred_element_type=jnp.float32)
    h = jnp.maximum(h + b1_ref[...], 0.0)
    acc_ref[...] += jnp.dot(h.astype(jnp.bfloat16), w2_ref[...],
                            preferred_element_type=jnp.float32)

    @pl.when(pl.program_id(1) == pl.num_programs(1) - 1)
    def _():
        z = acc_ref[...] + b2_ref[...] + x_ref[...].astype(jnp.float32)
        mean = jnp.mean(z, axis=-1, keepdims=True)
        var = jnp.mean(jnp.square(z - mean), axis=-1, keepdims=True)
        zn = (z - mean) * jax.lax.rsqrt(var + eps)
        o_ref[...] = (zn * g_ref[...] + bb_ref[...]).astype(o_ref.dtype)


def ffn_residual_layernorm(x, w1, b1, w2, b2, gamma, beta,
                           eps=1e-5, out_dtype=jnp.float32):
    """LayerNorm(x + relu(x@w1 + b1) @ w2 + b2).  x: (M, D)."""
    M, D = x.shape
    F = w1.shape[1]
    tm = _pick_tile(M, max_tile=_EPILOGUE_MAX_TM, min_tiles=2)
    tf = _pick_tile(F, max_tile=_FFN_MAX_TF)
    kernel = functools.partial(_ffn_res_ln_kernel, eps=eps)
    cparams = _cparams(
        ("parallel", "arbitrary"),
        [((tm, D), jnp.bfloat16), ((D, tf), jnp.bfloat16),
         ((1, tf), jnp.float32), ((tf, D), jnp.bfloat16),
         ((1, D), jnp.float32), ((1, D), jnp.float32), ((1, D), jnp.float32),
         ((tm, D), out_dtype)],
        resident_bytes=_nbytes((tm, D), jnp.float32)
        + _nbytes((tm, tf), jnp.float32))
    return pl.pallas_call(
        kernel,
        out_shape=jax.ShapeDtypeStruct((M, D), out_dtype),
        grid=(M // tm, F // tf),
        in_specs=[
            pl.BlockSpec((tm, D), lambda i, f: (i, 0)),
            pl.BlockSpec((D, tf), lambda i, f: (0, f)),
            pl.BlockSpec((1, tf), lambda i, f: (0, f)),
            pl.BlockSpec((tf, D), lambda i, f: (f, 0)),
            pl.BlockSpec((1, D), lambda i, f: (0, 0)),
            pl.BlockSpec((1, D), lambda i, f: (0, 0)),
            pl.BlockSpec((1, D), lambda i, f: (0, 0)),
        ],
        out_specs=pl.BlockSpec((tm, D), lambda i, f: (i, 0)),
        scratch_shapes=[pltpu.VMEM((tm, D), jnp.float32)],
        compiler_params=cparams,
    )(x.astype(jnp.bfloat16), w1.astype(jnp.bfloat16),
      b1.reshape(1, F).astype(jnp.float32), w2.astype(jnp.bfloat16),
      b2.reshape(1, D).astype(jnp.float32),
      gamma.reshape(1, D).astype(jnp.float32),
      beta.reshape(1, D).astype(jnp.float32))


# -----------------------------------------------------------------------------
# Kernel 4: scaled dot-product attention, one (batch, head, query-tile) per
# grid step.  K/V blocks stay resident across query tiles (index_map constant
# in qi); mask is the compact (B, 1, {1|Sq}, Sk) tensor.  ctx & probs in bf16.
# -----------------------------------------------------------------------------
def _attn_kernel(q_ref, k_ref, v_ref, m_ref, ctx_ref, probs_ref, *, scale):
    q = q_ref[0, 0]        # (tq, Dh) bf16
    k = k_ref[0, 0]        # (Sk, Dh) bf16
    v = v_ref[0, 0]        # (Sk, Dh) bf16
    mask = m_ref[0, 0]     # ({1|tq}, Sk) f32

    # Contract over Dh without materializing k.T.
    s = jax.lax.dot_general(q, k, (((1,), (1,)), ((), ())),
                            preferred_element_type=jnp.float32) * scale
    s = jnp.where(mask == 0.0, -1e9, s)

    m = jnp.max(s, axis=-1, keepdims=True)
    e = jnp.exp(s - m)
    # NOTE: approx EUP reciprocal -> returned probability rows sum to ~1
    # (within ~1e-3 relative), not exactly 1.
    p = e * pl.reciprocal(jnp.sum(e, axis=-1, keepdims=True), approx=True)

    probs_ref[0, 0] = p.astype(probs_ref.dtype)
    ctx_ref[0, 0] = jnp.dot(p.astype(v.dtype), v,
                            preferred_element_type=jnp.float32
                            ).astype(ctx_ref.dtype)


def fused_attention(q, k, v, mask, *, scale):
    """q,k,v: (B, H, S, Dh) bf16; mask: (B, 1, {1|Sq}, Sk).  Returns bf16."""
    B, H, Sq, Dh = q.shape
    Sk = k.shape[2]
    Mq = mask.shape[2]
    tq = _pick_tile(Sq, max_tile=512)
    mask = mask.astype(jnp.float32)

    mq_blk = tq if Mq == Sq else 1
    if Mq == Sq:
        mask_map = lambda b, h, qi: (b, 0, qi, 0)
    else:
        mask_map = lambda b, h, qi: (b, 0, 0, 0)

    kernel = functools.partial(_attn_kernel, scale=scale)
    cparams = _cparams(
        ("parallel", "parallel", "arbitrary"),
        [((tq, Dh), jnp.bfloat16), ((Sk, Dh), jnp.bfloat16),
         ((Sk, Dh), jnp.bfloat16), ((mq_blk, Sk), jnp.float32),
         ((tq, Dh), jnp.bfloat16), ((tq, Sk), jnp.bfloat16)])
    return pl.pallas_call(
        kernel,
        out_shape=(
            jax.ShapeDtypeStruct((B, H, Sq, Dh), jnp.bfloat16),
            jax.ShapeDtypeStruct((B, H, Sq, Sk), jnp.bfloat16),
        ),
        grid=(B, H, Sq // tq),
        in_specs=[
            pl.BlockSpec((1, 1, tq, Dh), lambda b, h, qi: (b, h, qi, 0)),
            pl.BlockSpec((1, 1, Sk, Dh), lambda b, h, qi: (b, h, 0, 0)),
            pl.BlockSpec((1, 1, Sk, Dh), lambda b, h, qi: (b, h, 0, 0)),
            pl.BlockSpec((1, 1, mq_blk, Sk), mask_map),
        ],
        out_specs=(
            pl.BlockSpec((1, 1, tq, Dh), lambda b, h, qi: (b, h, qi, 0)),
            pl.BlockSpec((1, 1, tq, Sk), lambda b, h, qi: (b, h, qi, 0)),
        ),
        compiler_params=cparams,
    )(q, k, v, mask)


# -----------------------------------------------------------------------------
# Module-level glue (reshapes / head split-merge / parameter plumbing)
# Dropout is identity (eval-mode semantics).
# -----------------------------------------------------------------------------
def decoder_layer(params, x, enc_output, src_mask, tgt_mask, num_heads):
    B, Sq, D = x.shape
    Sk = enc_output.shape[1]
    Dh = D // num_heads
    scale = 1.0 / math.sqrt(Dh)

    x2d = x.reshape(B * Sq, D).astype(jnp.bfloat16)

    # ---- self-attention (fused QKV projection) + residual + norm1 ----
    sa = params["self_attn"]
    qkv = matmul_bias(x2d, sa["wqkv"], sa["bqkv"])
    # TODO(synk): head split/merge transposes left to XLA (see header note).
    qkv = qkv.reshape(B, Sq, 3, num_heads, Dh).transpose(2, 0, 3, 1, 4)
    ctx, block1 = fused_attention(qkv[0], qkv[1], qkv[2], tgt_mask, scale=scale)
    ctx2d = ctx.transpose(0, 2, 1, 3).reshape(B * Sq, D)
    x2d = matmul_residual_layernorm(ctx2d, sa["wo"], sa["bo"], x2d,
                                    params["norm1_g"], params["norm1_b"])

    # ---- cross-attention (fused KV projection) + residual + norm2 ----
    ca = params["cross_attn"]
    enc2d = enc_output.reshape(B * Sk, D).astype(jnp.bfloat16)
    q = matmul_bias(x2d, ca["wq"], ca["bq"])
    kv = matmul_bias(enc2d, ca["wkv"], ca["bkv"])
    Q = q.reshape(B, Sq, num_heads, Dh).transpose(0, 2, 1, 3)
    kv = kv.reshape(B, Sk, 2, num_heads, Dh).transpose(2, 0, 3, 1, 4)
    ctx, block2 = fused_attention(Q, kv[0], kv[1], src_mask, scale=scale)
    ctx2d = ctx.transpose(0, 2, 1, 3).reshape(B * Sq, D)
    x2d = matmul_residual_layernorm(ctx2d, ca["wo"], ca["bo"], x2d,
                                    params["norm2_g"], params["norm2_b"])

    # ---- fused feed-forward + residual + norm3 (f32 module output) ----
    f = params["ffn"]
    out2d = ffn_residual_layernorm(x2d, f["w1"], f["b1"], f["w2"], f["b2"],
                                   params["norm3_g"], params["norm3_b"],
                                   out_dtype=jnp.float32)

    return out2d.reshape(B, Sq, D), block1, block2


# -----------------------------------------------------------------------------
# Deterministic parameter init (weights stored bf16 ONCE; biases/LN params f32)
# -----------------------------------------------------------------------------
def init_params(key, d_model, d_ff):
    def lin(k, d_in, d_out):
        w = (0.02 * jax.random.normal(k, (d_in, d_out), jnp.float32)
             ).astype(jnp.bfloat16)
        b = jnp.zeros((d_out,), jnp.float32)
        return w, b

    keys = jax.random.split(key, 10)

    wq, bq = lin(keys[0], d_model, d_model)
    wk, bk = lin(keys[1], d_model, d_model)
    wv, bv = lin(keys[2], d_model, d_model)
    wo, bo = lin(keys[3], d_model, d_model)
    self_attn = dict(wqkv=jnp.concatenate([wq, wk, wv], axis=1),
                     bqkv=jnp.concatenate([bq, bk, bv], axis=0),
                     wo=wo, bo=bo)

    wq, bq = lin(keys[4], d_model, d_model)
    wk, bk = lin(keys[5], d_model, d_model)
    wv, bv = lin(keys[6], d_model, d_model)
    wo, bo = lin(keys[7], d_model, d_model)
    cross_attn = dict(wq=wq, bq=bq,
                      wkv=jnp.concatenate([wk, wv], axis=1),
                      bkv=jnp.concatenate([bk, bv], axis=0),
                      wo=wo, bo=bo)

    w1, b1 = lin(keys[8], d_model, d_ff)
    w2, b2 = lin(keys[9], d_ff, d_model)

    return dict(
        self_attn=self_attn,
        cross_attn=cross_attn,
        ffn=dict(w1=w1, b1=b1, w2=w2, b2=b2),
        norm1_g=jnp.ones((d_model,), jnp.float32),
        norm1_b=jnp.zeros((d_model,), jnp.float32),
        norm2_g=jnp.ones((d_model,), jnp.float32),
        norm2_b=jnp.zeros((d_model,), jnp.float32),
        norm3_g=jnp.ones((d_model,), jnp.float32),
        norm3_b=jnp.zeros((d_model,), jnp.float32),
    )


# -----------------------------------------------------------------------------
# Pure-JAX reference (f32 math, bf16-rounded weights) for a sanity check
# -----------------------------------------------------------------------------
def reference_decoder_layer(params, x, enc_output, src_mask, tgt_mask, H):
    params = jax.tree_util.tree_map(lambda a: a.astype(jnp.float32), params)
    D = x.shape[-1]
    Dh = D // H

    def mha(q_in, k_in, v_in, wq, bq, wk, bk, wv, bv, wo, bo, mask):
        B, Sq, _ = q_in.shape
        Sk = k_in.shape[1]
        split = lambda y, S: y.reshape(B, S, H, Dh).transpose(0, 2, 1, 3)
        Q = split(q_in @ wq + bq, Sq)
        K = split(k_in @ wk + bk, Sk)
        V = split(v_in @ wv + bv, Sk)
        s = jnp.einsum('bhqd,bhkd->bhqk', Q, K) / math.sqrt(Dh)
        s = jnp.where(mask == 0.0, -1e9, s)
        p = jax.nn.softmax(s, axis=-1)
        ctx = jnp.einsum('bhqk,bhkd->bhqd', p, V)
        ctx = ctx.transpose(0, 2, 1, 3).reshape(B, Sq, D)
        return ctx @ wo + bo, p

    def ln(z, g, b, eps=1e-5):
        mu = z.mean(-1, keepdims=True)
        var = ((z - mu) ** 2).mean(-1, keepdims=True)
        return (z - mu) / jnp.sqrt(var + eps) * g + b

    sa = params["self_attn"]
    wq, wk, wv = jnp.split(sa["wqkv"], 3, axis=1)
    bq, bk, bv = jnp.split(sa["bqkv"], 3, axis=0)
    a, p1 = mha(x, x, x, wq, bq, wk, bk, wv, bv, sa["wo"], sa["bo"], tgt_mask)
    x = ln(x + a, params["norm1_g"], params["norm1_b"])

    ca = params["cross_attn"]
    wk, wv = jnp.split(ca["wkv"], 2, axis=1)
    bk, bv = jnp.split(ca["bkv"], 2, axis=0)
    a, p2 = mha(x, enc_output, enc_output, ca["wq"], ca["bq"], wk, bk, wv, bv,
                ca["wo"], ca["bo"], src_mask)
    x = ln(x + a, params["norm2_g"], params["norm2_b"])

    f = params["ffn"]
    h = jnp.maximum(x @ f["w1"] + f["b1"], 0.0)
    x = ln(x + h @ f["w2"] + f["b2"], params["norm3_g"], params["norm3_b"])
    return x, p1, p2


if __name__ == "__main__":
    B, S, D, H, F = 2, 8, 32, 4, 64  # batch, seq, d_model, num_heads, d_ff

    key = jax.random.PRNGKey(0)
    k_params, k_x, k_enc = jax.random.split(key, 3)

    params = init_params(k_params, D, F)
    x = jax.random.normal(k_x, (B, S, D), jnp.float32)
    enc_output = jax.random.normal(k_enc, (B, S, D), jnp.float32)

    # src_mask: (B, 1, 1, S) all-ones; tgt_mask: (B, 1, S, S) causal
    src_mask = jnp.ones((B, 1, 1, S), jnp.float32)
    tgt_mask = jnp.tril(jnp.ones((S, S), jnp.float32))[None, None, :, :]
    tgt_mask = jnp.broadcast_to(tgt_mask, (B, 1, S, S))

    out, block1, block2 = decoder_layer(params, x, enc_output,
                                        src_mask, tgt_mask, H)
    jax.block_until_ready((out, block1, block2))

    assert out.shape == (B, S, D)
    assert block1.shape == (B, H, S, S)
    assert block2.shape == (B, H, S, S)

    # Numerical sanity check against a pure-JAX f32 reference (bf16 matmuls,
    # bf16 intermediate activations & probabilities -> loose tolerance).
    ref_out, ref_p1, ref_p2 = reference_decoder_layer(
        params, x, enc_output, src_mask, tgt_mask, H)
    assert bool(jnp.allclose(out, ref_out, atol=1e-1, rtol=1e-1))
    assert bool(jnp.allclose(block1.astype(jnp.float32), ref_p1,
                             atol=5e-2, rtol=5e-2))
    assert bool(jnp.allclose(block2.astype(jnp.float32), ref_p2,
                             atol=5e-2, rtol=5e-2))

    print("KERNEL_OK")
</pallas_src>

<mosaic_0001>
module attributes {stable_mosaic.version = 11 : i64} {
  func.func @_matmul_bias_kernel(%arg0: i32, %arg1: i32, %arg2: i32, %arg3: memref<16x32xbf16, #tpu.memory_space<vmem>>, %arg4: memref<32x96xbf16, #tpu.memory_space<vmem>>, %arg5: memref<1x96xf32, #tpu.memory_space<vmem>>, %arg6: memref<16x96xbf16, #tpu.memory_space<vmem>>, %arg7: memref<16x96xf32, #tpu.memory_space<vmem>>) attributes {dimension_semantics = [#tpu.dimension_semantics<parallel>, #tpu.dimension_semantics<parallel>, #tpu.dimension_semantics<arbitrary>], iteration_bounds = array<i64: 1, 1, 1>, scalar_prefetch = 0 : i64, scratch_operands = 1 : i64, tpu.core_type = #tpu.core_type<tc>, window_params = [{transform_indices = @transform_0, window_bounds = array<i64: 16, 32>}, {transform_indices = @transform_1, window_bounds = array<i64: 32, 96>}, {transform_indices = @transform_2, window_bounds = array<i64: 1, 96>}, {transform_indices = @transform_3, window_bounds = array<i64: 16, 96>}]} {
    %c0_i32 = arith.constant 0 : i32
    %0 = arith.cmpi eq, %arg2, %c0_i32 : i32
    %1 = arith.extui %0 : i1 to i32
    %c0_i32_0 = arith.constant 0 : i32
    %2 = arith.cmpi ne, %1, %c0_i32_0 : i32
    scf.if %2 {
      %cst_10 = arith.constant 0.000000e+00 : f32
      %12 = vector.broadcast %cst_10 : f32 to vector<16x96xf32>
      %c0_11 = arith.constant 0 : index
      %c0_12 = arith.constant 0 : index
      %13 = vector.load %arg7[%c0_11, %c0_12] : memref<16x96xf32, #tpu.memory_space<vmem>>, vector<16x96xf32>
      tpu.vector_store %arg7[%c0_11, %c0_12], %12 {strides = array<i32>} : memref<16x96xf32, #tpu.memory_space<vmem>>, vector<16x96xf32>,
    } else {
    }
    %c0 = arith.constant 0 : index
    %c0_1 = arith.constant 0 : index
    %3 = vector.load %arg7[%c0, %c0_1] : memref<16x96xf32, #tpu.memory_space<vmem>>, vector<16x96xf32>
    %c0_2 = arith.constant 0 : index
    %c0_3 = arith.constant 0 : index
    %4 = vector.load %arg3[%c0_2, %c0_3] : memref<16x32xbf16, #tpu.memory_space<vmem>>, vector<16x32xbf16>
    %c0_4 = arith.constant 0 : index
    %c0_5 = arith.constant 0 : index
    %5 = vector.load %arg4[%c0_4, %c0_5] : memref<32x96xbf16, #tpu.memory_space<vmem>>, vector<32x96xbf16>
    %cst = arith.constant dense<0.000000e+00> : vector<16x96xf32>
    %6 = tpu.matmul %4, %5, %cst {dimension_numbers = #tpu.dot_dimension_numbers<[1], [0], [0], [1], [0, 0, 1, 1], [], []>} : vector<16x32xbf16>, vector<32x96xbf16>, vector<16x96xf32> -> vector<16x96xf32>
    %7 = arith.addf %3, %6 : vector<16x96xf32>
    %c0_6 = arith.constant 0 : index
    %c0_7 = arith.constant 0 : index
    %8 = vector.load %arg7[%c0_6, %c0_7] : memref<16x96xf32, #tpu.memory_space<vmem>>, vector<16x96xf32>
    tpu.vector_store %arg7[%c0_6, %c0_7], %7 {strides = array<i32>} : memref<16x96xf32, #tpu.memory_space<vmem>>, vector<16x96xf32>,
    %c0_i32_8 = arith.constant 0 : i32
    %9 = arith.cmpi eq, %arg2, %c0_i32_8 : i32
    %10 = arith.extui %9 : i1 to i32
    %c0_i32_9 = arith.constant 0 : i32
    %11 = arith.cmpi ne, %10, %c0_i32_9 : i32
    scf.if %11 {
      %c0_10 = arith.constant 0 : index
      %c0_11 = arith.constant 0 : index
      %12 = vector.load %arg7[%c0_10, %c0_11] : memref<16x96xf32, #tpu.memory_space<vmem>>, vector<16x96xf32>
      %c0_12 = arith.constant 0 : index
      %c0_13 = arith.constant 0 : index
      %13 = vector.load %arg5[%c0_12, %c0_13] : memref<1x96xf32, #tpu.memory_space<vmem>>, vector<1x96xf32>
      %14 = vector.broadcast %13 : vector<1x96xf32> to vector<16x96xf32>
      %15 = arith.addf %12, %14 : vector<16x96xf32>
      %16 = arith.truncf %15 : vector<16x96xf32> to vector<16x96xbf16>
      %c0_14 = arith.constant 0 : index
      %c0_15 = arith.constant 0 : index
      %17 = vector.load %arg6[%c0_14, %c0_15] : memref<16x96xbf16, #tpu.memory_space<vmem>>, vector<16x96xbf16>
      tpu.vector_store %arg6[%c0_14, %c0_15], %16 {strides = array<i32>} : memref<16x96xbf16, #tpu.memory_space<vmem>>, vector<16x96xbf16>,
    } else {
    }
    return
  }
  func.func @transform_0(%arg0: i32, %arg1: i32, %arg2: i32) -> (i32, i32) {
    %c0_i32 = arith.constant 0 : i32
    return %arg0, %arg2 : i32, i32
  }
  func.func @transform_1(%arg0: i32, %arg1: i32, %arg2: i32) -> (i32, i32) {
    %c0_i32 = arith.constant 0 : i32
    return %arg2, %arg1 : i32, i32
  }
  func.func @transform_2(%arg0: i32, %arg1: i32, %arg2: i32) -> (i32, i32) {
    %c0_i32 = arith.constant 0 : i32
    %c0_i32_0 = arith.constant 0 : i32
    return %c0_i32, %arg1 : i32, i32
  }
  func.func @transform_3(%arg0: i32, %arg1: i32, %arg2: i32) -> (i32, i32) {
    %c0_i32 = arith.constant 0 : i32
    return %arg0, %arg1 : i32, i32
  }
}

</mosaic_0001>

<llo_original>
// kernel: tpu_custom_call.1
$region0: #{tpu_custom_call.1}
  #allocation0 [shape = 'u32[]', space=smem, size = 0x4, offset = 0x4, fixed_abs, tag = 'smem constant byte address 0x4 - core index']
  #allocation1 [shape = 'u32[144,128]{1,0:T(1,128)}', space=vmem, size = 0x12000, scoped, tag = 'internal scratch']
  #allocation2 [shape = 'f32[16,96]{1,0:T(8,128)}', space=vmem, size = 0x2000, scoped, tag = 'scratch operand']
  %s0 = inlined_call_operand.hbm [shape: bf16[16,32], index: 0, kind: input, shape index: {}]
  %s1 = inlined_call_operand.hbm [shape: bf16[32,96], index: 1, kind: input, shape index: {}]
  %s2 = inlined_call_operand.vmem [shape: f32[1,96], index: 2, kind: input, shape index: {}]
  %s3 = inlined_call_operand.hbm [shape: bf16[16,96], index: 3, kind: output, shape index: {}]
  %s4 = sld [smem:[#allocation0]]
  $region38: #{tpu_custom_call.1} parent=0
    _
  %s6 = ssub.s32 1, %s4
  %s7 = scalar_select 0, %s6, %s4
  $region1: #{tpu_custom_call.1} parent=0
    #allocation3 [shape = 'u8[4096]{0}', space=vmem, size = 0x1000, scoped, tag = 'input window, operand 0, single buffered']
    #allocation4 [shape = 's32[1]{0}', space=sflag, size = 0x4, scoped, tag = 'scoped memory for tpu_custom_call.1']
    #allocation5 [shape = 's32[1]{0}', space=sflag, size = 0x4, scoped, tag = 'scoped memory for tpu_custom_call.1']
    #allocation6 [shape = 'u8[8192]{0}', space=vmem, size = 0x2000, scoped, tag = 'input window, operand 1, single buffered']
    #allocation7 [shape = 's32[1]{0}', space=sflag, size = 0x4, scoped, tag = 'scoped memory for tpu_custom_call.1']
    #allocation8 [shape = 'u8[4096]{0}', space=vmem, size = 0x1000, scoped, tag = 'output window, operand 0, single buffered']
    %8 = vsyncpa [#allocation4], 0
    %9 = vsyncpa [#allocation7], 0
    %10 = vsyncpa [#allocation5], 0
    // Predicated region
    $region2: #{tpu_custom_call.1} parent=1 // pred_check
      _
    $region3: #{tpu_custom_call.1} parent=1 // pred_check_branch
      %12 = sbr.rel (0) target = $region5
    $region4: #{tpu_custom_call.1} parent=1 // pred_region
      %s14 = ssub.s32 128, 128
      %15 = vsyncadd [#allocation4], %s14
      %s16 = sshll.u32 [#allocation3], 4
      %s17 = int_to_ptr.vmem [resolvable:$true] %s16
      %22 = dma.hbm_to_vmem [thread:$0]  %s0, 128, %s17, [#allocation4], 64, 64, 4
    $region5: #{tpu_custom_call.1} parent=1 // pred_fallthru
      _
    // Predicated region
    $region6: #{tpu_custom_call.1} parent=1 // pred_check
      _
    $region7: #{tpu_custom_call.1} parent=1 // pred_check_branch
      %24 = sbr.rel (0) target = $region9
    $region8: #{tpu_custom_call.1} parent=1 // pred_region
      %s26 = ssub.s32 256, 256
      %27 = vsyncadd [#allocation7], %s26
      %s28 = sshll.u32 [#allocation6], 4
      %s29 = int_to_ptr.vmem [resolvable:$true] %s28
      %34 = dma.hbm_to_vmem [thread:$0]  %s1, 256, %s29, [#allocation7], 64, 64, 4
    $region9: #{tpu_custom_call.1} parent=1 // pred_fallthru
      _
    // Predicated region
    $region10: #{tpu_custom_call.1} parent=1 // pred_check
      _
    $region11: #{tpu_custom_call.1} parent=1 // pred_check_branch
      %36 = sbr.rel (0) target = $region13
    $region12: #{tpu_custom_call.1} parent=1 // pred_region
      _
    $region13: #{tpu_custom_call.1} parent=1 // pred_fallthru
      _
    // Predicated region
    $region14: #{tpu_custom_call.1} parent=1 // pred_check
      _
    $region15: #{tpu_custom_call.1} parent=1 // pred_check_branch
      %38 = sbr.rel (0) target = $region17
    $region16: #{tpu_custom_call.1} parent=1 // pred_region
      %39 = dma.done [#allocation4], 128
    $region17: #{tpu_custom_call.1} parent=1 // pred_fallthru
      _
    // Predicated region
    $region18: #{tpu_custom_call.1} parent=1 // pred_check
      _
    $region19: #{tpu_custom_call.1} parent=1 // pred_check_branch
      %41 = sbr.rel (0) target = $region21
    $region20: #{tpu_custom_call.1} parent=1 // pred_region
      %42 = dma.done [#allocation7], 256
    $region21: #{tpu_custom_call.1} parent=1 // pred_fallthru
      _
    %p44 = scmp.eq.s32.totalorder 0, 0
    // Predicated region
    $region22: #{tpu_custom_call.1} parent=1 // pred_check
      %p45 = pneg %p44
    $region23: #{tpu_custom_call.1} parent=1 // pred_check_branch
      %47 = sbr.rel (%p45) target = $region25
    $region24: #{tpu_custom_call.1} parent=1 // pred_region
      %vm48 = vcmask 785408
      %49 = vst.msk [vmem:[#allocation2] sm:$0xff] %vm48, 0.0
      %50 = vst.msk [vmem:[#allocation2 + $0x8] sm:$0xff] %vm48, 0.0
    $region25: #{tpu_custom_call.1} parent=1 // pred_fallthru
      _
    %v51 = vld [vmem:[#allocation2] sm:$0xff]
    %v52 = vld [vmem:[#allocation2 + $0x8] sm:$0xff]
    %v53 = vld [vmem:[#allocation3] sm:$0xf]
    %v54 = vld [vmem:[#allocation3 + $0x4] sm:$0xf]
    %v55 = vld [vmem:[#allocation6] sm:$0xf]
    %v56 = vld [vmem:[#allocation6 + $0x4] sm:$0xf]
    %v57 = vld [vmem:[#allocation6 + $0x8] sm:$0xf]
    %v58 = vld [vmem:[#allocation6 + $0xc] sm:$0xf]
    %v61 = vunpack.c.l.b16 %v53
    %v62 = vunpack.c.l.b16 %v54
    %v63 = vpack.c.b16 %v62, %v61
    %v68 = vunpack.c.l.b16 %v55
    %v69 = vunpack.c.l.b16 %v56
    %v70 = vunpack.c.l.b16 %v57
    %v71 = vunpack.c.l.b16 %v58
    %v72 = vpack.c.b16 %v69, %v68
    %v73 = vpack.c.b16 %v71, %v70
    %vm76 = vcmask 261120
    %v78 = vsel %vm76, %v63, 0
    %80 = vmatprep.subr.bf16.mxu0 0
    %81 = vmatpush1.bf16.msra.mxu0 %v72
    %82 = vmatprep.subr.bf16.mxu0 0
    %83 = vmatpush1.bf16.msra.mxu0 %v73
    %84 = vmatprep.subr.bf16.mxu0 0
    %85 = vmatpush1.bf16.msra.mxu0 0
    %86 = vmatprep.subr.bf16.mxu0 0
    %87 = vmatpush1.bf16.msra.mxu0 0
    %88 = vmatprep.subr.bf16.mxu0 0
    %89 = vmatpush1.bf16.msra.mxu0 0
    %90 = vmatprep.subr.bf16.mxu0 0
    %91 = vmatpush1.bf16.msra.mxu0 0
    %92 = vmatprep.subr.bf16.mxu0 0
    %93 = vmatpush1.bf16.msra.mxu0 0
    %94 = vmatprep.subr.bf16.mxu0 0
    %95 = vmatpush1.bf16.msra.mxu0 0
    %96 = vmatprep.subr.bf16.mxu0 0
    %97 = vmatpush1.bf16.msra.mxu0 0
    %98 = vmatprep.subr.bf16.mxu0 0
    %99 = vmatpush1.bf16.msra.mxu0 0
    %100 = vmatprep.subr.bf16.mxu0 0
    %101 = vmatpush1.bf16.msra.mxu0 0
    %102 = vmatprep.subr.bf16.mxu0 0
    %103 = vmatpush1.bf16.msra.mxu0 0
    %104 = vmatprep.subr.bf16.mxu0 0
    %105 = vmatpush1.bf16.msra.mxu0 0
    %106 = vmatprep.subr.bf16.mxu0 0
    %107 = vmatpush1.bf16.msra.mxu0 0
    %108 = vmatprep.subr.bf16.mxu0 0
    %109 = vmatpush1.bf16.msra.mxu0 0
    %110 = vmatprep.subr.bf16.mxu0 0
    %111 = vmatpush1.bf16.msra.mxu0 0
    %112 = vmatprep.mubr.bf16.mxu0 0
    %113 = vmatmul.mubr.bf16.gmra.mrb[0].mxu0 %v78
    %v114 = vpop.f32.mrb[0].mxu0
    %v115 = vadd.f32 0.0, %v114
    %v116 = vpop.f32.mrb[0].mxu0
    %v117 = vpop.f32.mrb[0].mxu0
    %v118 = vadd.f32 0.0, %v117
    %v119 = vpop.f32.mrb[0].mxu0
    %120 = vdwg.mxu0
    %v121 = vadd.f32 %v51, %v115
    %v122 = vadd.f32 %v52, %v118
    %vm123 = vcmask 785408
    %124 = vst.msk [vmem:[#allocation2] sm:$0xff] %vm123, %v121
    %125 = vst.msk [vmem:[#allocation2 + $0x8] sm:$0xff] %vm123, %v122
    // Predicated region
    $region26: #{tpu_custom_call.1} parent=1 // pred_check
      %p126 = pneg %p44
    $region27: #{tpu_custom_call.1} parent=1 // pred_check_branch
      %128 = sbr.rel (%p126) target = $region29
    $region28: #{tpu_custom_call.1} parent=1 // pred_region
      %v129 = vld [vmem:[#allocation2] sm:$0xff]
      %v130 = vld [vmem:[#allocation2 + $0x8] sm:$0xff]
      %v131 = vld [vmem:[%s2] sm:$0x1]
      %v133 = vlaneseq
      %v134 = vshrl.u32 %v133, 7
      %v135 = vsub.s32 0, %v134
      %v136 = vrot.slane %v131, %v135
      %v138 = vadd.f32 %v129, %v136
      %v139 = vadd.f32 %v130, %v136
      %v140 = vpack.c.bf16 %v139, %v138
      %v142 = vunpack.c.l.b16 %v140
      %v143 = vunpack.c.h.b16 %v140
      %v144 = vpack.c.b16 %v142, %v142
      %v145 = vpack.c.b16 %v143, %v143
      %vm148 = vcmask 781312
      %149 = vst.msk [vmem:[#allocation8] sm:$0xf] %vm148, %v144
      %150 = vst.msk [vmem:[#allocation8 + $0x4] sm:$0xf] %vm148, %v145
    $region29: #{tpu_custom_call.1} parent=1 // pred_fallthru
      _
    // Predicated region
    $region30: #{tpu_custom_call.1} parent=1 // pred_check
      _
    $region31: #{tpu_custom_call.1} parent=1 // pred_check_branch
      %152 = sbr.rel (0) target = $region33
    $region32: #{tpu_custom_call.1} parent=1 // pred_region
      %s154 = ssub.s32 128, 128
      %155 = vsyncadd [#allocation5], %s154
      %s156 = sshll.u32 [#allocation8], 4
      %s157 = int_to_ptr.vmem [resolvable:$true] %s156
      %162 = dma.vmem_to_hbm [thread:$0]  %s157, 128, %s3, [#allocation5], 64, 64, 4
    $region33: #{tpu_custom_call.1} parent=1 // pred_fallthru
      _
    // Predicated region
    $region34: #{tpu_custom_call.1} parent=1 // pred_check
      _
    $region35: #{tpu_custom_call.1} parent=1 // pred_check_branch
      %164 = sbr.rel (0) target = $region37
    $region36: #{tpu_custom_call.1} parent=1 // pred_region
      %165 = dma.done [#allocation5], 128
    $region37: #{tpu_custom_call.1} parent=1 // pred_fallthru
      _
    %166 = vsyncpa [#allocation4], 1
    %167 = vsyncpa [#allocation7], 1
    %168 = vsyncpa [#allocation5], 1

</llo_original>
